<compile_context>
chip_gen: v6e
topology: v6e:2x2x1
jax: 0.10.0
libtpu: 0.0.40
codegen_flags: <defaults>
</compile_context>

<pallas_src>
import jax
import jax.numpy as jnp
from jax import lax
from jax.experimental import pallas as pl
from jax.experimental.pallas import tpu as pltpu

EPS = 1e-5  # nn.BatchNorm2d default


def conv_bn_relu_kernel(w_ref, sh_ref, p_ref, o_ref):
    # w_ref : (M, K)   BN-scale-folded conv weight rows (M = n_experts*planes)
    # sh_ref: (M, 1)   f32 folded BatchNorm shift
    # p_ref : (K, NT)  im2col patch columns for this tile (lane-dense NT)
    # o_ref : (M, NT)  fused conv + BN + ReLU output tile
    z = jnp.dot(w_ref[...], p_ref[...], preferred_element_type=jnp.float32)
    o_ref[...] = jnp.maximum(z + sh_ref[...], 0.0).astype(o_ref.dtype)


def _choose_n_tile(n_extent, per_col_bytes, budget_bytes, want_two_steps):
    """Largest lane-dense (multiple-of-128) divisor of n_extent within budget."""
    if n_extent % 128 != 0:
        return n_extent                       # full-extent block (small sizes)
    divs = [t for t in range(128, n_extent + 1, 128) if n_extent % t == 0]
    fit = [t for t in divs if t * per_col_bytes <= budget_bytes] or [128]
    n_tile = max(fit)
    if want_two_steps and n_tile == n_extent:
        smaller = [t for t in fit if t < n_extent]
        if smaller:                           # >= 2 grid steps (v7x megacore)
            n_tile = max(smaller)
    return n_tile


def multi_experts_stage(x, weight, gamma, beta, running_mean, running_var, *,
                        stride=2, eps=EPS, compute_dtype=None, out_dtype=None,
                        vmem_budget_bytes=24 << 20):
    """Fused Conv2d(3x3, pad=1, bias=False) + eval BatchNorm2d + ReLU.

    x: (B, C, H, W).  weight: (P, C, 3, 3) or stacked experts (E, P, C, 3, 3).
    BN params: (P,) or (E, P).  Returns (B, P, Ho, Wo) or (E, B, P, Ho, Wo).
    """
    single = weight.ndim == 4
    if single:
        weight, gamma, beta = weight[None], gamma[None], beta[None]
        running_mean, running_var = running_mean[None], running_var[None]

    E, P, C, kh, kw = weight.shape
    B, Cx, H, W = x.shape
    assert Cx == C and (kh, kw) == (3, 3)
    pad = 1
    Ho = (H + 2 * pad - kh) // stride + 1
    Wo = (W + 2 * pad - kw) // stride + 1
    K, M, HoWo = C * kh * kw, E * P, Ho * Wo

    out_dtype = x.dtype if out_dtype is None else out_dtype
    in_dtype = x.dtype if compute_dtype is None else compute_dtype
    in_bytes = jnp.dtype(in_dtype).itemsize
    out_bytes = jnp.dtype(out_dtype).itemsize

    # im2col as a single XLA op: (B, C*9, Ho, Wo), K index = c*9 + dh*3 + dw
    # (matches weight.reshape(P, C*3*3) ordering).
    patches = lax.conv_general_dilated_patches(
        x, (kh, kw), (stride, stride), ((pad, pad), (pad, pad)))
    patches = patches.reshape(B, K, HoWo).astype(in_dtype)

    # Fold eval-mode BatchNorm: scale goes into the weight rows (in f32, then
    # cast); only the per-channel shift reaches the kernel epilogue.
    scale = (gamma * lax.rsqrt(running_var + eps)).astype(jnp.float32)   # (E,P)
    shift = (beta - scale * running_mean).astype(jnp.float32)            # (E,P)
    wmat = weight.astype(jnp.float32).reshape(E, P, K) * scale[..., None]
    wmat = wmat.reshape(M, K).astype(in_dtype)
    sh = shift.reshape(M, 1)                                             # f32

    resident_bytes = 2 * (M * K * in_bytes + M * 4)      # weight + shift bufs
    per_col_bytes = 2 * (K * in_bytes + M * out_bytes)   # double-buffered tile
    budget = max(vmem_budget_bytes - resident_bytes, 1 << 20)

    if HoWo >= 128:
        # (b, n) grid: no batch-fold input transpose, no output NCHW transpose.
        n_tile = _choose_n_tile(HoWo, per_col_bytes, budget,
                                want_two_steps=False)   # batch axis splits cores
        grid = (B, HoWo // n_tile)
        vmem_limit = int(min(max(resident_bytes + per_col_bytes * n_tile
                                 + (8 << 20), 32 << 20), 64 << 20))
        out3d = pl.pallas_call(
            conv_bn_relu_kernel,
            out_shape=jax.ShapeDtypeStruct((B, M, HoWo), out_dtype),
            grid_spec=pltpu.PrefetchScalarGridSpec(
                num_scalar_prefetch=0,
                grid=grid,
                in_specs=[
                    pl.BlockSpec((M, K), lambda b, n: (0, 0)),     # resident
                    pl.BlockSpec((M, 1), lambda b, n: (0, 0)),     # resident
                    pl.BlockSpec((pl.Squeezed(), K, n_tile),
                                 lambda b, n: (b, 0, n)),
                ],
                out_specs=pl.BlockSpec((pl.Squeezed(), M, n_tile),
                                       lambda b, n: (b, 0, n)),
            ),
            compiler_params=pltpu.CompilerParams(
                dimension_semantics=("parallel", "parallel"),
                vmem_limit_bytes=vmem_limit),
        )(wmat, sh, patches)
        out = out3d.reshape(B, E, P, Ho, Wo).transpose(1, 0, 2, 3, 4)
    else:
        # Small spatial: fold batch into the matmul N axis → lane-dense stores.
        N = B * HoWo
        pat2d = patches.transpose(1, 0, 2).reshape(K, N)
        n_tile = _choose_n_tile(N, per_col_bytes, budget,
                                want_two_steps=(N >= 256))
        grid = (N // n_tile,)
        vmem_limit = int(min(max(resident_bytes + per_col_bytes * n_tile
                                 + (8 << 20), 32 << 20), 64 << 20))
        out2d = pl.pallas_call(
            conv_bn_relu_kernel,
            out_shape=jax.ShapeDtypeStruct((M, N), out_dtype),
            grid_spec=pltpu.PrefetchScalarGridSpec(
                num_scalar_prefetch=0,
                grid=grid,
                in_specs=[
                    pl.BlockSpec((M, K), lambda n: (0, 0)),        # resident
                    pl.BlockSpec((M, 1), lambda n: (0, 0)),        # resident
                    pl.BlockSpec((K, n_tile), lambda n: (0, n)),   # patch cols
                ],
                out_specs=pl.BlockSpec((M, n_tile), lambda n: (0, n)),
            ),
            compiler_params=pltpu.CompilerParams(
                dimension_semantics=("parallel",),
                vmem_limit_bytes=vmem_limit),
        )(wmat, sh, pat2d)
        out = out2d.reshape(E, P, B, Ho, Wo).transpose(0, 2, 1, 3, 4)

    return out[0] if single else out


def _reference(x, weight, gamma, beta, mean, var, stride, eps=EPS):
    y = lax.conv_general_dilated(
        x, weight, (stride, stride), ((1, 1), (1, 1)),
        dimension_numbers=("NCHW", "OIHW", "NCHW"),
        precision=lax.Precision.HIGHEST)
    s = (gamma / jnp.sqrt(var + eps)).reshape(1, -1, 1, 1)
    b = (beta - gamma * mean / jnp.sqrt(var + eps)).reshape(1, -1, 1, 1)
    return jnp.maximum(y * s + b, 0.0)


if __name__ == "__main__":
    inplanes, planes, stride = 4, 8, 2
    key = jax.random.PRNGKey(0)
    kx, kw, kx2, kw2 = jax.random.split(key, 4)
    fan_in = inplanes * 3 * 3

    # ---- Test 1: single expert, f32, small spatial (batch-folded layout) ----
    B, H, W = 2, 16, 16
    x = jax.random.normal(kx, (B, inplanes, H, W), dtype=jnp.float32)
    weight = jax.random.normal(kw, (planes, inplanes, 3, 3),
                               dtype=jnp.float32) / jnp.sqrt(float(fan_in))
    gamma = 1.0 + 0.1 * jnp.arange(planes, dtype=jnp.float32)
    beta = 0.01 * jnp.arange(planes, dtype=jnp.float32)
    running_mean = 0.05 * jnp.arange(planes, dtype=jnp.float32) - 0.2
    running_var = 1.0 + 0.1 * jnp.arange(planes, dtype=jnp.float32)

    y = multi_experts_stage(x, weight, gamma, beta, running_mean, running_var,
                            stride=stride)
    y = jax.block_until_ready(y)
    y_ref = _reference(x, weight, gamma, beta, running_mean, running_var, stride)
    assert y.shape == (B, planes, H // stride, W // stride)
    assert jnp.allclose(y, y_ref, atol=1e-3, rtol=1e-3), "f32 single-expert mismatch"

    # ---- Test 2: bf16 matmul inputs (all generations), f32 accumulate -------
    y_bf = multi_experts_stage(x, weight, gamma, beta, running_mean, running_var,
                               stride=stride, compute_dtype=jnp.bfloat16)
    y_bf = jax.block_until_ready(y_bf)
    scale = gamma / jnp.sqrt(running_var + EPS)
    shift = beta - scale * running_mean
    w_fold_bf = (weight * scale.reshape(-1, 1, 1, 1)
                 ).astype(jnp.bfloat16).astype(jnp.float32)
    x_bf = x.astype(jnp.bfloat16).astype(jnp.float32)
    y_bf_ref = jnp.maximum(
        lax.conv_general_dilated(
            x_bf, w_fold_bf, (stride, stride), ((1, 1), (1, 1)),
            dimension_numbers=("NCHW", "OIHW", "NCHW"),
            precision=lax.Precision.HIGHEST)
        + shift.reshape(1, -1, 1, 1), 0.0)
    assert jnp.allclose(y_bf, y_bf_ref, atol=5e-3, rtol=5e-3), "bf16 mismatch"

    # ---- Test 3: 3 experts fused into one matmul, larger spatial ((b,n) grid)
    E = 3
    B2, H2, W2 = 2, 32, 32
    x2 = jax.random.normal(kx2, (B2, inplanes, H2, W2), dtype=jnp.float32)
    weights = jax.random.normal(kw2, (E, planes, inplanes, 3, 3),
                                dtype=jnp.float32) / jnp.sqrt(float(fan_in))
    ar = jnp.arange(E * planes, dtype=jnp.float32).reshape(E, planes)
    gammas = 1.0 + 0.05 * ar
    betas = 0.02 * ar - 0.1
    means = 0.03 * ar - 0.1
    vars_ = 1.0 + 0.07 * ar

    y3 = multi_experts_stage(x2, weights, gammas, betas, means, vars_,
                             stride=stride)
    y3 = jax.block_until_ready(y3)
    assert y3.shape == (E, B2, planes, H2 // stride, W2 // stride)
    for e in range(E):
        y3_ref = _reference(x2, weights[e], gammas[e], betas[e], means[e],
                            vars_[e], stride)
        assert jnp.allclose(y3[e], y3_ref, atol=1e-3, rtol=1e-3), \
            f"f32 fused-expert {e} mismatch"

    print("KERNEL_OK")
</pallas_src>

<mosaic_0001>
module attributes {stable_mosaic.version = 11 : i64} {
  func.func @conv_bn_relu_kernel(%arg0: i32, %arg1: memref<8x36xf32, #tpu.memory_space<vmem>>, %arg2: memref<8x1xf32, #tpu.memory_space<vmem>>, %arg3: memref<36x128xf32, #tpu.memory_space<vmem>>, %arg4: memref<8x128xf32, #tpu.memory_space<vmem>>) attributes {dimension_semantics = [#tpu.dimension_semantics<parallel>], iteration_bounds = array<i64: 1>, scalar_prefetch = 0 : i64, scratch_operands = 0 : i64, tpu.core_type = #tpu.core_type<tc>, window_params = [{pipeline_mode = #tpu.pipeline_mode<synchronous>, transform_indices = @transform_0, window_bounds = array<i64: 8, 36>}, {pipeline_mode = #tpu.pipeline_mode<synchronous>, transform_indices = @transform_1, window_bounds = array<i64: 8, 1>}, {transform_indices = @transform_2, window_bounds = array<i64: 36, 128>}, {transform_indices = @transform_3, window_bounds = array<i64: 8, 128>}]} {
    %c0 = arith.constant 0 : index
    %c0_0 = arith.constant 0 : index
    %0 = vector.load %arg1[%c0, %c0_0] : memref<8x36xf32, #tpu.memory_space<vmem>>, vector<8x36xf32>
    %c0_1 = arith.constant 0 : index
    %c0_2 = arith.constant 0 : index
    %1 = vector.load %arg3[%c0_1, %c0_2] : memref<36x128xf32, #tpu.memory_space<vmem>>, vector<36x128xf32>
    %cst = arith.constant dense<0.000000e+00> : vector<8x128xf32>
    %2 = tpu.matmul %0, %1, %cst {dimension_numbers = #tpu.dot_dimension_numbers<[1], [0], [0], [1], [0, 0, 1, 1], [], []>} : vector<8x36xf32>, vector<36x128xf32>, vector<8x128xf32> -> vector<8x128xf32>
    %c0_3 = arith.constant 0 : index
    %c0_4 = arith.constant 0 : index
    %3 = vector.load %arg2[%c0_3, %c0_4] : memref<8x1xf32, #tpu.memory_space<vmem>>, vector<8x1xf32>
    %4 = vector.broadcast %3 : vector<8x1xf32> to vector<8x128xf32>
    %5 = arith.addf %2, %4 : vector<8x128xf32>
    %cst_5 = arith.constant 0.000000e+00 : f32
    %6 = vector.broadcast %cst_5 : f32 to vector<8x128xf32>
    %7 = arith.maximumf %5, %6 : vector<8x128xf32>
    %c0_6 = arith.constant 0 : index
    %c0_7 = arith.constant 0 : index
    %8 = vector.load %arg4[%c0_6, %c0_7] : memref<8x128xf32, #tpu.memory_space<vmem>>, vector<8x128xf32>
    tpu.vector_store %arg4[%c0_6, %c0_7], %7 {strides = array<i32>} : memref<8x128xf32, #tpu.memory_space<vmem>>, vector<8x128xf32>,
    return
  }
  func.func @transform_0(%arg0: i32) -> (i32, i32) {
    %c0_i32 = arith.constant 0 : i32
    %c0_i32_0 = arith.constant 0 : i32
    %c0_i32_1 = arith.constant 0 : i32
    return %c0_i32, %c0_i32_0 : i32, i32
  }
  func.func @transform_1(%arg0: i32) -> (i32, i32) {
    %c0_i32 = arith.constant 0 : i32
    %c0_i32_0 = arith.constant 0 : i32
    %c0_i32_1 = arith.constant 0 : i32
    return %c0_i32, %c0_i32_0 : i32, i32
  }
  func.func @transform_2(%arg0: i32) -> (i32, i32) {
    %c0_i32 = arith.constant 0 : i32
    %c0_i32_0 = arith.constant 0 : i32
    return %c0_i32, %arg0 : i32, i32
  }
  func.func @transform_3(%arg0: i32) -> (i32, i32) {
    %c0_i32 = arith.constant 0 : i32
    %c0_i32_0 = arith.constant 0 : i32
    return %c0_i32, %arg0 : i32, i32
  }
}

</mosaic_0001>

<llo_original>
// kernel: tpu_custom_call.1
$region0: #{tpu_custom_call.1}
  #allocation0 [shape = 'u32[]', space=smem, size = 0x4, offset = 0x4, fixed_abs, tag = 'smem constant byte address 0x4 - core index']
  #allocation1 [shape = 'u32[144,128]{1,0:T(1,128)}', space=vmem, size = 0x12000, scoped, tag = 'internal scratch']
  %s0 = inlined_call_operand.vmem [shape: f32[8,36], index: 0, kind: input, shape index: {}]
  %s1 = inlined_call_operand.vmem [shape: f32[8,1], index: 1, kind: input, shape index: {}]
  %s2 = inlined_call_operand.hbm [shape: f32[36,128], index: 2, kind: input, shape index: {}]
  %s3 = inlined_call_operand.hbm [shape: f32[8,128], index: 3, kind: output, shape index: {}]
  %s4 = sld [smem:[#allocation0]]
  $region26: #{tpu_custom_call.1} parent=0
    _
  %s6 = ssub.s32 1, %s4
  %s7 = scalar_select 0, %s6, %s4
  $region1: #{tpu_custom_call.1} parent=0
    #allocation2 [shape = 'u8[20480]{0}', space=vmem, size = 0x5000, scoped, tag = 'input window, operand 2, single buffered']
    #allocation3 [shape = 's32[1]{0}', space=sflag, size = 0x4, scoped, tag = 'scoped memory for tpu_custom_call.1']
    #allocation4 [shape = 's32[1]{0}', space=sflag, size = 0x4, scoped, tag = 'scoped memory for tpu_custom_call.1']
    #allocation5 [shape = 'u8[4096]{0}', space=vmem, size = 0x1000, scoped, tag = 'output window, operand 0, single buffered']
    %8 = vsyncpa [#allocation3], 0
    %9 = vsyncpa [#allocation4], 0
    // Predicated region
    $region2: #{tpu_custom_call.1} parent=1 // pred_check
      _
    $region3: #{tpu_custom_call.1} parent=1 // pred_check_branch
      %11 = sbr.rel (0) target = $region5
    $region4: #{tpu_custom_call.1} parent=1 // pred_region
      _
    $region5: #{tpu_custom_call.1} parent=1 // pred_fallthru
      _
    // Predicated region
    $region6: #{tpu_custom_call.1} parent=1 // pred_check
      _
    $region7: #{tpu_custom_call.1} parent=1 // pred_check_branch
      %13 = sbr.rel (0) target = $region9
    $region8: #{tpu_custom_call.1} parent=1 // pred_region
      _
    $region9: #{tpu_custom_call.1} parent=1 // pred_fallthru
      _
    // Predicated region
    $region10: #{tpu_custom_call.1} parent=1 // pred_check
      _
    $region11: #{tpu_custom_call.1} parent=1 // pred_check_branch
      %15 = sbr.rel (0) target = $region13
    $region12: #{tpu_custom_call.1} parent=1 // pred_region
      %s17 = ssub.s32 640, 640
      %18 = vsyncadd [#allocation3], %s17
      %s19 = sshll.u32 [#allocation2], 4
      %s20 = int_to_ptr.vmem [resolvable:$true] %s19
      %25 = dma.hbm_to_vmem [thread:$0]  %s2, 640, %s20, [#allocation3], 128, 128, 8
    $region13: #{tpu_custom_call.1} parent=1 // pred_fallthru
      _
    // Predicated region
    $region14: #{tpu_custom_call.1} parent=1 // pred_check
      _
    $region15: #{tpu_custom_call.1} parent=1 // pred_check_branch
      %27 = sbr.rel (0) target = $region17
    $region16: #{tpu_custom_call.1} parent=1 // pred_region
      %28 = dma.done [#allocation3], 640
    $region17: #{tpu_custom_call.1} parent=1 // pred_fallthru
      _
    %v29 = vld [vmem:[%s0] sm:$0xff]
    %v30 = vld [vmem:[#allocation2] sm:$0xff]
    %v31 = vld [vmem:[#allocation2 + $0x8] sm:$0xff]
    %v32 = vld [vmem:[#allocation2 + $0x10] sm:$0xff]
    %v33 = vld [vmem:[#allocation2 + $0x18] sm:$0xff]
    %v34 = vld [vmem:[#allocation2 + $0x20] sm:$0xf]
    %v35 = vld [vmem:[%s1] sm:$0xff]
    %37 = vset.pattern.permute.xlu0 0
    %38 = vperm.xlu0 %37, %v35
    %v39 = vpop.permute.xlu0 %38
    %vm41 = vcmask 293888
    %v43 = vsel %vm41, %v29, 0
    %vm45 = vcmask 1043456
    %v47 = vsel %vm45, %v34, 0
    %49 = vmatprep.subr.mxu0 0.0
    %50 = vmatpush1.msra.mxu0 0.0
    %51 = vmatprep.subr.mxu0 0.0
    %52 = vmatpush1.msra.mxu0 0.0
    %53 = vmatprep.subr.mxu0 0.0
    %54 = vmatpush1.msra.mxu0 0.0
    %55 = vmatprep.subr.mxu0 0.0
    %56 = vmatpush1.msra.mxu0 0.0
    %57 = vmatprep.subr.mxu0 0.0
    %58 = vmatpush1.msra.mxu0 0.0
    %59 = vmatprep.subr.mxu0 0.0
    %60 = vmatpush1.msra.mxu0 0.0
    %61 = vmatprep.subr.mxu0 0.0
    %62 = vmatpush1.msra.mxu0 0.0
    %63 = vmatprep.subr.mxu0 0.0
    %64 = vmatpush1.msra.mxu0 0.0
    %65 = vmatprep.subr.mxu0 0.0
    %66 = vmatpush1.msra.mxu0 0.0
    %67 = vmatprep.subr.mxu0 0.0
    %68 = vmatpush1.msra.mxu0 0.0
    %69 = vmatprep.subr.mxu0 0.0
    %70 = vmatpush1.msra.mxu0 0.0
    %71 = vmatprep.subr.mxu0 0.0
    %72 = vmatpush1.msra.mxu0 %v47
    %73 = vmatprep.subr.mxu0 0.0
    %74 = vmatpush1.msra.mxu0 %v33
    %75 = vmatprep.subr.mxu0 0.0
    %76 = vmatpush1.msra.mxu0 %v32
    %77 = vmatprep.subr.mxu0 0.0
    %78 = vmatpush1.msra.mxu0 %v31
    %79 = vmatprep.subr.mxu0 0.0
    %80 = vmatpush1.msra.mxu0 %v30
    %81 = vmatprep.subr.mxu0 0.0
    %82 = vmatpush2.msra.mxu0 0.0
    %83 = vmatprep.subr.mxu0 0.0
    %84 = vmatpush2.msra.mxu0 0.0
    %85 = vmatprep.subr.mxu0 0.0
    %86 = vmatpush2.msra.mxu0 0.0
    %87 = vmatprep.subr.mxu0 0.0
    %88 = vmatpush2.msra.mxu0 0.0
    %89 = vmatprep.subr.mxu0 0.0
    %90 = vmatpush2.msra.mxu0 0.0
    %91 = vmatprep.subr.mxu0 0.0
    %92 = vmatpush2.msra.mxu0 0.0
    %93 = vmatprep.subr.mxu0 0.0
    %94 = vmatpush2.msra.mxu0 0.0
    %95 = vmatprep.subr.mxu0 0.0
    %96 = vmatpush2.msra.mxu0 0.0
    %97 = vmatprep.subr.mxu0 0.0
    %98 = vmatpush2.msra.mxu0 0.0
    %99 = vmatprep.subr.mxu0 0.0
    %100 = vmatpush2.msra.mxu0 0.0
    %101 = vmatprep.subr.mxu0 0.0
    %102 = vmatpush2.msra.mxu0 0.0
    %103 = vmatprep.subr.mxu0 0.0
    %104 = vmatpush2.msra.mxu0 0.0
    %105 = vmatprep.subr.mxu0 0.0
    %106 = vmatpush2.msra.mxu0 0.0
    %107 = vmatprep.subr.mxu0 0.0
    %108 = vmatpush2.msra.mxu0 0.0
    %109 = vmatprep.subr.mxu0 0.0
    %110 = vmatpush2.msra.mxu0 0.0
    %111 = vmatprep.subr.mxu0 0.0
    %112 = vmatpush2.msra.mxu0 0.0
    %113 = vmatprep.mubr.f32.mxu0 0.0
    %114 = vmatmul.mubr.f32.gmra.mxu0 %v43
    %v115 = vpop.f32.mrf.mxu0
    %v116 = vadd.f32 %v39, %v115
    %v117 = vpop.f32.mrf.mxu0
    %118 = vdwg.mxu0
    %v119 = vmax.f32 %v116, 0.0
    %120 = vst [vmem:[#allocation5] sm:$0xff] %v119
    // Predicated region
    $region18: #{tpu_custom_call.1} parent=1 // pred_check
      _
    $region19: #{tpu_custom_call.1} parent=1 // pred_check_branch
      %122 = sbr.rel (0) target = $region21
    $region20: #{tpu_custom_call.1} parent=1 // pred_region
      %s124 = ssub.s32 128, 128
      %125 = vsyncadd [#allocation4], %s124
      %s127 = sshll.u32 [#allocation5], 4
      %s128 = int_to_ptr.vmem [resolvable:$true] %s127
      %130 = dma.vmem_to_hbm [thread:$0]  %s128, 128, %s3, [#allocation4]
    $region21: #{tpu_custom_call.1} parent=1 // pred_fallthru
      _
    // Predicated region
    $region22: #{tpu_custom_call.1} parent=1 // pred_check
      _
    $region23: #{tpu_custom_call.1} parent=1 // pred_check_branch
      %132 = sbr.rel (0) target = $region25
    $region24: #{tpu_custom_call.1} parent=1 // pred_region
      %133 = dma.done [#allocation4], 128
    $region25: #{tpu_custom_call.1} parent=1 // pred_fallthru
      _
    %134 = vsyncpa [#allocation3], 1
    %135 = vsyncpa [#allocation4], 1

</llo_original>
